<compile_context>
chip_gen: v6e
topology: v6e:2x2x1
jax: 0.10.0
libtpu: 0.0.40
codegen_flags: <defaults>
</compile_context>

<pallas_src>
import functools

import jax
import jax.numpy as jnp
from jax import lax
from jax.experimental import pallas as pl
from jax.experimental.pallas import tpu as pltpu


def _round_up(x, m):
    return ((x + m - 1) // m) * m


def _vmem_capacity_bytes():
    try:
        return int(pltpu.get_tpu_info().vmem_capacity_bytes)
    except Exception:
        return 64 << 20  # v7x per-core VMEM; conservative fallback.


# ----------------------------------------------------------------------------
# Path 1: feat fully VMEM-resident, one-hot selection matrix on the MXU.
# ----------------------------------------------------------------------------
def _resident_kernel(idx_ref, feat_ref, out_ref, *, k_pool, tc, matmul_dtype):
    """out = 0.5 * (S @ feat); feat resident, S built in (tm, tc) column chunks."""
    n, d = feat_ref.shape
    tm = out_ref.shape[0]
    mm_dtype = matmul_dtype if matmul_dtype is not None else feat_ref.dtype

    idx = idx_ref[...]  # (tm, K) int32

    def s_chunk(idx_shifted, col):
        # S[r, c] = #{k : idx_shifted[r, k] == c}.
        # int32 accumulate, init from first compare, single cast at the end.
        s = (idx_shifted[:, 0:1] == col).astype(jnp.int32)
        for k in range(1, k_pool):
            s = s + (idx_shifted[:, k:k + 1] == col).astype(jnp.int32)
        return s.astype(mm_dtype)

    nc = n // tc
    rem = n - nc * tc
    acc = jnp.zeros((tm, d), jnp.float32)

    if nc > 0:
        # Hoisted: chunk offset is folded into idx (a (tm,K) subtract), not
        # added to the (tm,tc) iota.
        col_main = lax.broadcasted_iota(jnp.int32, (tm, tc), 1)

        def body(c, acc):
            c0 = pl.multiple_of(c * tc, tc)
            s = s_chunk(idx - c0, col_main)
            f = feat_ref[pl.ds(c0, tc), :].astype(mm_dtype)
            return acc + jnp.dot(s, f, preferred_element_type=jnp.float32)

        acc = lax.fori_loop(0, nc, body, acc, unroll=nc <= 8)

    if rem > 0:
        col_rem = lax.broadcasted_iota(jnp.int32, (tm, rem), 1)
        s = s_chunk(idx - nc * tc, col_rem)
        f = feat_ref[pl.ds(nc * tc, rem), :].astype(mm_dtype)
        acc = acc + jnp.dot(s, f, preferred_element_type=jnp.float32)

    out_ref[...] = (0.5 * acc).astype(out_ref.dtype)


def _call_resident(feat, idx, *, tm, tc, matmul_dtype):
    n, d = feat.shape
    m, k = idx.shape
    itemsize = jnp.dtype(feat.dtype).itemsize
    m_pad = _round_up(m, tm)
    idx_p = jnp.pad(idx, ((0, m_pad - m), (0, 0)))  # tiny; feat is NOT padded

    cap = _vmem_capacity_bytes()
    need = (n * d * itemsize            # resident feat (single copy)
            + 3 * tm * d * itemsize     # pipelined output blocks
            + 3 * tm * k * 4            # idx blocks
            + 6 * tm * tc * 4           # S / iota temporaries
            + 4 * tm * d                # f32 accumulator carry
            + (4 << 20))                # slack
    vlim = int(min(max(need, 32 << 20), int(0.9 * cap)))

    kernel = functools.partial(_resident_kernel, k_pool=k, tc=tc,
                               matmul_dtype=matmul_dtype)
    out = pl.pallas_call(
        kernel,
        out_shape=jax.ShapeDtypeStruct((m_pad, d), feat.dtype),
        grid_spec=pltpu.PrefetchScalarGridSpec(
            num_scalar_prefetch=0,
            grid=(m_pad // tm,),
            in_specs=[
                pl.BlockSpec((tm, k), lambda i: (i, 0)),
                # Full-array block with a constant index -> DMA'd once,
                # reused by every output tile (no re-streaming, no feat pad).
                pl.BlockSpec((n, d), lambda i: (0, 0)),
            ],
            out_specs=pl.BlockSpec((tm, d), lambda i: (i, 0)),
        ),
        compiler_params=pltpu.CompilerParams(
            dimension_semantics=("parallel",),
            vmem_limit_bytes=vlim),
    )(idx_p, feat)
    return out[:m]


# ----------------------------------------------------------------------------
# Path 2: DMA row-gather (feat stays in HBM, pool_idx scalar-prefetched).
# ----------------------------------------------------------------------------
def _gather_kernel(idx_ref, feat_hbm, out_ref, gbuf, sem, *, k_pool, tm):
    """Gather feat[pool_idx] rows via per-row DMAs, then 0.5 * sum over K."""
    i = pl.program_id(0)
    base = i * (tm * k_pool)

    def row_copy(r, k):
        row = idx_ref[base + r * k_pool + k]          # scalar from SMEM
        return pltpu.make_async_copy(
            feat_hbm.at[pl.ds(row, 1), :],            # (1, D) row in HBM
            gbuf.at[k, pl.ds(r, 1), :],               # (1, D) slot in VMEM
            sem.at[k])

    @pl.loop(0, tm)
    def _start(r):
        for k in range(k_pool):
            row_copy(r, k).start()

    @pl.loop(0, tm)
    def _wait(r):
        for k in range(k_pool):
            row_copy(r, k).wait()

    acc = gbuf[0].astype(jnp.float32)
    for k in range(1, k_pool):
        acc = acc + gbuf[k].astype(jnp.float32)
    out_ref[...] = (0.5 * acc).astype(out_ref.dtype)


def _call_gather(feat, idx, *, tm):
    n, d = feat.shape
    m, k = idx.shape
    itemsize = jnp.dtype(feat.dtype).itemsize
    m_pad = _round_up(m, tm)
    idx_flat = jnp.pad(idx, ((0, m_pad - m), (0, 0))).reshape(-1)

    cap = _vmem_capacity_bytes()
    need = (k + 3) * tm * d * itemsize + 4 * tm * d + (4 << 20)
    vlim = int(min(max(need, 32 << 20), int(0.9 * cap)))

    kernel = functools.partial(_gather_kernel, k_pool=k, tm=tm)
    out = pl.pallas_call(
        kernel,
        out_shape=jax.ShapeDtypeStruct((m_pad, d), feat.dtype),
        grid_spec=pltpu.PrefetchScalarGridSpec(
            num_scalar_prefetch=1,                      # pool_idx -> SMEM
            grid=(m_pad // tm,),
            in_specs=[pl.BlockSpec(memory_space=pl.ANY)],  # feat stays in HBM
            out_specs=pl.BlockSpec((tm, d), lambda i, idx_ref: (i, 0)),
            scratch_shapes=[
                pltpu.VMEM((k, tm, d), feat.dtype),     # gathered rows
                pltpu.SemaphoreType.DMA((k,)),
            ],
        ),
        compiler_params=pltpu.CompilerParams(
            dimension_semantics=("parallel",),
            vmem_limit_bytes=vlim),
    )(idx_flat, feat)
    return out[:m]


# ----------------------------------------------------------------------------
# Public wrappers
# ----------------------------------------------------------------------------
def unpool_new_vs(feat, pool_idx, *, tm=None, tc_inner=None, force_gather=None,
                  matmul_dtype=None):
    """new_vs = 0.5 * sum(feat[pool_idx], axis=1) via Pallas TPU kernels."""
    feat = jnp.asarray(feat)
    pool_idx = jnp.asarray(pool_idx).astype(jnp.int32)
    n, d = feat.shape
    m, k = pool_idx.shape
    itemsize = jnp.dtype(feat.dtype).itemsize

    cap = _vmem_capacity_bytes()
    feat_bytes = n * d * itemsize

    if tm is None:
        tm = min(512, _round_up(m, 8))
        # v7x megacore: make sure the single "parallel" axis has >= 2 tiles.
        if m >= 16 and _round_up(m, tm) // tm < 2:
            tm = _round_up((m + 1) // 2, 8)

    if force_gather is None:
        # Gather when feat cannot be VMEM-resident, or when the gathered rows
        # touch only a small fraction of feat (8x small-DMA penalty fudge).
        use_gather = (feat_bytes > int(0.40 * cap)) or (m * k * 8 < n)
    else:
        use_gather = bool(force_gather)

    if use_gather:
        # TODO(synk): chunk over M so the scalar-prefetched index table stays
        # comfortably inside SMEM.
        max_rows = max(tm, ((64 * 1024) // max(k, 1)) // tm * tm)
        if m > max_rows:
            parts = [_call_gather(feat, pool_idx[s:s + max_rows], tm=tm)
                     for s in range(0, m, max_rows)]
            return jnp.concatenate(parts, axis=0)
        return _call_gather(feat, pool_idx, tm=tm)

    tc = tc_inner if tc_inner is not None else min(n, 1024)
    return _call_resident(feat, pool_idx, tm=tm, tc=tc,
                          matmul_dtype=matmul_dtype)


def unpool_forward(feat, pool_idx, **kwargs):
    """Mirrors UnPool.forward tensor semantics: returns (feat_cat, new_vs)."""
    new_vs = unpool_new_vs(feat, pool_idx, **kwargs)
    # TODO(synk): for large N, write new_vs into a donated (N+M, D) buffer
    # (input_output_aliases) instead of re-copying feat through HBM here.
    feat_cat = jnp.concatenate([feat, new_vs], axis=0)
    return feat_cat, new_vs


if __name__ == "__main__":
    key = jax.random.PRNGKey(0)
    k1, k2, k3, k4 = jax.random.split(key, 4)

    def ref_new_vs(f, idx):
        return 0.5 * jnp.sum(f[idx], axis=1)

    # --- Test A: default path (feat VMEM-resident, single column chunk). ----
    N, D, M, K = 16, 128, 6, 2
    feat_a = jax.random.normal(k1, (N, D), dtype=jnp.float32)
    idx_a = jax.random.randint(k2, (M, K), 0, N, dtype=jnp.int32)

    feat_cat, new_vs = unpool_forward(feat_a, idx_a)
    new_vs = jax.block_until_ready(new_vs)
    feat_cat = jax.block_until_ready(feat_cat)

    ref_a = ref_new_vs(feat_a, idx_a)
    assert new_vs.shape == (M, D)
    assert feat_cat.shape == (N + M, D)
    assert jnp.allclose(new_vs, ref_a, atol=1e-6, rtol=1e-6)
    assert jnp.allclose(feat_cat, jnp.concatenate([feat_a, ref_a], axis=0),
                        atol=1e-6, rtol=1e-6)

    # --- Test B: both paths at odd shapes (K=3, duplicate indices,
    #     multi-tile "parallel" grid, ragged column chunks). ------------------
    N2, D2, M2, K2 = 60, 128, 24, 3
    feat_b = jax.random.normal(k3, (N2, D2), dtype=jnp.float32)
    idx_b = jax.random.randint(k4, (M2, K2), 0, N2, dtype=jnp.int32)
    idx_b = idx_b.at[0].set(jnp.array([5, 5, 17], dtype=jnp.int32))  # multiplicity

    ref_b = ref_new_vs(feat_b, idx_b)

    got_gather = jax.block_until_ready(
        unpool_new_vs(feat_b, idx_b, force_gather=True))
    assert got_gather.shape == (M2, D2)
    assert jnp.allclose(got_gather, ref_b, atol=1e-6, rtol=1e-6)

    got_resident = jax.block_until_ready(
        unpool_new_vs(feat_b, idx_b, force_gather=False, tc_inner=8))
    assert jnp.allclose(got_resident, ref_b, atol=1e-6, rtol=1e-6)

    print("KERNEL_OK")
</pallas_src>

<mosaic_0001>
module attributes {stable_mosaic.version = 11 : i64} {
  func.func @_resident_kernel(%arg0: i32, %arg1: memref<8x2xi32, #tpu.memory_space<vmem>>, %arg2: memref<16x128xf32, #tpu.memory_space<vmem>>, %arg3: memref<8x128xf32, #tpu.memory_space<vmem>>) attributes {dimension_semantics = [#tpu.dimension_semantics<parallel>], iteration_bounds = array<i64: 1>, scalar_prefetch = 0 : i64, scratch_operands = 0 : i64, tpu.core_type = #tpu.core_type<tc>, window_params = [{transform_indices = @transform_0, window_bounds = array<i64: 8, 2>}, {pipeline_mode = #tpu.pipeline_mode<synchronous>, transform_indices = @transform_1, window_bounds = array<i64: 16, 128>}, {transform_indices = @transform_2, window_bounds = array<i64: 8, 128>}]} {
    %c0 = arith.constant 0 : index
    %c0_0 = arith.constant 0 : index
    %0 = vector.load %arg1[%c0, %c0_0] : memref<8x2xi32, #tpu.memory_space<vmem>>, vector<8x2xi32>
    %cst = arith.constant 0.000000e+00 : f32
    %1 = vector.broadcast %cst : f32 to vector<8x128xf32>
    %2 = tpu.iota {dimensions = array<i32: 1>} : vector<8x16xi32>
    %c0_i32 = arith.constant 0 : i32
    %c16_i32 = arith.constant 16 : i32
    %3 = arith.muli %c0_i32, %c16_i32 : i32
    %4 = tpu.assume_multiple %3, 16 : i32
    %5 = vector.broadcast %4 : i32 to vector<8x2xi32>
    %6 = arith.subi %0, %5 : vector<8x2xi32>
    %7 = vector.extract_strided_slice %6 {offsets = [0, 0], sizes = [8, 1], strides = [1, 1]} : vector<8x2xi32> to vector<8x1xi32>
    %8 = vector.broadcast %7 : vector<8x1xi32> to vector<8x16xi32>
    %9 = arith.cmpi eq, %8, %2 : vector<8x16xi32>
    %10 = arith.extui %9 : vector<8x16xi1> to vector<8x16xi32>
    %11 = vector.extract_strided_slice %6 {offsets = [0, 1], sizes = [8, 1], strides = [1, 1]} : vector<8x2xi32> to vector<8x1xi32>
    %12 = vector.broadcast %11 : vector<8x1xi32> to vector<8x16xi32>
    %13 = arith.cmpi eq, %12, %2 : vector<8x16xi32>
    %14 = arith.extui %13 : vector<8x16xi1> to vector<8x16xi32>
    %15 = arith.addi %10, %14 : vector<8x16xi32>
    %16 = arith.sitofp %15 : vector<8x16xi32> to vector<8x16xf32>
    %17 = arith.index_cast %4 : i32 to index
    %c0_1 = arith.constant 0 : index
    %18 = vector.load %arg2[%17, %c0_1] : memref<16x128xf32, #tpu.memory_space<vmem>>, vector<16x128xf32>
    %cst_2 = arith.constant dense<0.000000e+00> : vector<8x128xf32>
    %19 = tpu.matmul %16, %18, %cst_2 {dimension_numbers = #tpu.dot_dimension_numbers<[1], [0], [0], [1], [0, 0, 1, 1], [], []>} : vector<8x16xf32>, vector<16x128xf32>, vector<8x128xf32> -> vector<8x128xf32>
    %20 = arith.addf %1, %19 : vector<8x128xf32>
    %c1_i32 = arith.constant 1 : i32
    %cst_3 = arith.constant 5.000000e-01 : f32
    %21 = vector.broadcast %cst_3 : f32 to vector<8x128xf32>
    %22 = arith.mulf %21, %20 : vector<8x128xf32>
    %c0_4 = arith.constant 0 : index
    %c0_5 = arith.constant 0 : index
    %23 = vector.load %arg3[%c0_4, %c0_5] : memref<8x128xf32, #tpu.memory_space<vmem>>, vector<8x128xf32>
    tpu.vector_store %arg3[%c0_4, %c0_5], %22 {strides = array<i32>} : memref<8x128xf32, #tpu.memory_space<vmem>>, vector<8x128xf32>,
    return
  }
  func.func @transform_0(%arg0: i32) -> (i32, i32) {
    %c0_i32 = arith.constant 0 : i32
    %c0_i32_0 = arith.constant 0 : i32
    return %arg0, %c0_i32 : i32, i32
  }
  func.func @transform_1(%arg0: i32) -> (i32, i32) {
    %c0_i32 = arith.constant 0 : i32
    %c0_i32_0 = arith.constant 0 : i32
    %c0_i32_1 = arith.constant 0 : i32
    return %c0_i32, %c0_i32_0 : i32, i32
  }
  func.func @transform_2(%arg0: i32) -> (i32, i32) {
    %c0_i32 = arith.constant 0 : i32
    %c0_i32_0 = arith.constant 0 : i32
    return %arg0, %c0_i32 : i32, i32
  }
}

</mosaic_0001>

<llo_original>
// kernel: tpu_custom_call.1
$region0: #{tpu_custom_call.1}
  #allocation0 [shape = 'u32[]', space=smem, size = 0x4, offset = 0x4, fixed_abs, tag = 'smem constant byte address 0x4 - core index']
  #allocation1 [shape = 'u32[144,128]{1,0:T(1,128)}', space=vmem, size = 0x12000, scoped, tag = 'internal scratch']
  %s0 = inlined_call_operand.vmem [shape: s32[8,2], index: 0, kind: input, shape index: {}]
  %s1 = inlined_call_operand.hbm [shape: f32[16,128], index: 1, kind: input, shape index: {}]
  %s2 = inlined_call_operand.hbm [shape: f32[8,128], index: 2, kind: output, shape index: {}]
  %s3 = sld [smem:[#allocation0]]
  $region22: #{tpu_custom_call.1} parent=0
    _
  %s5 = ssub.s32 1, %s3
  %s6 = scalar_select 0, %s5, %s3
  $region1: #{tpu_custom_call.1} parent=0
    #allocation2 [shape = 'u8[8192]{0}', space=vmem, size = 0x2000, scoped, tag = 'input window, operand 1, single buffered']
    #allocation3 [shape = 's32[1]{0}', space=sflag, size = 0x4, scoped, tag = 'scoped memory for tpu_custom_call.1']
    #allocation4 [shape = 's32[1]{0}', space=sflag, size = 0x4, scoped, tag = 'scoped memory for tpu_custom_call.1']
    #allocation5 [shape = 'u8[4096]{0}', space=vmem, size = 0x1000, scoped, tag = 'output window, operand 0, single buffered']
    %7 = vsyncpa [#allocation3], 0
    %8 = vsyncpa [#allocation4], 0
    // Predicated region
    $region2: #{tpu_custom_call.1} parent=1 // pred_check
      _
    $region3: #{tpu_custom_call.1} parent=1 // pred_check_branch
      %10 = sbr.rel (0) target = $region5
    $region4: #{tpu_custom_call.1} parent=1 // pred_region
      _
    $region5: #{tpu_custom_call.1} parent=1 // pred_fallthru
      _
    // Predicated region
    $region6: #{tpu_custom_call.1} parent=1 // pred_check
      _
    $region7: #{tpu_custom_call.1} parent=1 // pred_check_branch
      %12 = sbr.rel (0) target = $region9
    $region8: #{tpu_custom_call.1} parent=1 // pred_region
      %s14 = ssub.s32 256, 256
      %15 = vsyncadd [#allocation3], %s14
      %s16 = sshll.u32 [#allocation2], 4
      %s17 = int_to_ptr.vmem [resolvable:$true] %s16
      %22 = dma.hbm_to_vmem [thread:$0]  %s1, 256, %s17, [#allocation3], 128, 128, 8
    $region9: #{tpu_custom_call.1} parent=1 // pred_fallthru
      _
    // Predicated region
    $region10: #{tpu_custom_call.1} parent=1 // pred_check
      _
    $region11: #{tpu_custom_call.1} parent=1 // pred_check_branch
      %24 = sbr.rel (0) target = $region13
    $region12: #{tpu_custom_call.1} parent=1 // pred_region
      %25 = dma.done [#allocation3], 256
    $region13: #{tpu_custom_call.1} parent=1 // pred_fallthru
      _
    %v26 = vld [vmem:[%s0] sm:$0xff]
    %v27 = vlaneseq
    %v28 = vand.u32 %v27, 127
    %v29 = vstv 0
    %v30 = vsub.s32 %v26, %v29
    %31 = vset.pattern.permute.xlu0 0
    %32 = vperm.xlu0 %31, %v30
    %v33 = vpop.permute.xlu0 %32
    %vm34 = vcmp.eq.s32.totalorder %v33, %v28
    %v35 = vsel %vm34, 1, 0
    %36 = vset.pattern.permute.xlu0 1
    %37 = vperm.xlu0 %36, %v30
    %v38 = vpop.permute.xlu0 %37
    %vm39 = vcmp.eq.s32.totalorder %v38, %v28
    %v40 = vsel %vm39, 1, 0
    %v41 = vadd.s32 %v35, %v40
    %v42 = vcvt.s32.f32 %v41
    %v43 = vld [vmem:[#allocation2] sm:$0xff]
    %v44 = vld [vmem:[#allocation2 + $0x8] sm:$0xff]
    %vm45 = vcmask 130048
    %v47 = vsel %vm45, %v42, 0
    %49 = vmatprep.subr.mxu0 0.0
    %50 = vmatpush1.msra.mxu0 0.0
    %51 = vmatprep.subr.mxu0 0.0
    %52 = vmatpush1.msra.mxu0 0.0
    %53 = vmatprep.subr.mxu0 0.0
    %54 = vmatpush1.msra.mxu0 0.0
    %55 = vmatprep.subr.mxu0 0.0
    %56 = vmatpush1.msra.mxu0 0.0
    %57 = vmatprep.subr.mxu0 0.0
    %58 = vmatpush1.msra.mxu0 0.0
    %59 = vmatprep.subr.mxu0 0.0
    %60 = vmatpush1.msra.mxu0 0.0
    %61 = vmatprep.subr.mxu0 0.0
    %62 = vmatpush1.msra.mxu0 0.0
    %63 = vmatprep.subr.mxu0 0.0
    %64 = vmatpush1.msra.mxu0 0.0
    %65 = vmatprep.subr.mxu0 0.0
    %66 = vmatpush1.msra.mxu0 0.0
    %67 = vmatprep.subr.mxu0 0.0
    %68 = vmatpush1.msra.mxu0 0.0
    %69 = vmatprep.subr.mxu0 0.0
    %70 = vmatpush1.msra.mxu0 0.0
    %71 = vmatprep.subr.mxu0 0.0
    %72 = vmatpush1.msra.mxu0 0.0
    %73 = vmatprep.subr.mxu0 0.0
    %74 = vmatpush1.msra.mxu0 0.0
    %75 = vmatprep.subr.mxu0 0.0
    %76 = vmatpush1.msra.mxu0 0.0
    %77 = vmatprep.subr.mxu0 0.0
    %78 = vmatpush1.msra.mxu0 %v44
    %79 = vmatprep.subr.mxu0 0.0
    %80 = vmatpush1.msra.mxu0 %v43
    %81 = vmatprep.subr.mxu0 0.0
    %82 = vmatpush2.msra.mxu0 0.0
    %83 = vmatprep.subr.mxu0 0.0
    %84 = vmatpush2.msra.mxu0 0.0
    %85 = vmatprep.subr.mxu0 0.0
    %86 = vmatpush2.msra.mxu0 0.0
    %87 = vmatprep.subr.mxu0 0.0
    %88 = vmatpush2.msra.mxu0 0.0
    %89 = vmatprep.subr.mxu0 0.0
    %90 = vmatpush2.msra.mxu0 0.0
    %91 = vmatprep.subr.mxu0 0.0
    %92 = vmatpush2.msra.mxu0 0.0
    %93 = vmatprep.subr.mxu0 0.0
    %94 = vmatpush2.msra.mxu0 0.0
    %95 = vmatprep.subr.mxu0 0.0
    %96 = vmatpush2.msra.mxu0 0.0
    %97 = vmatprep.subr.mxu0 0.0
    %98 = vmatpush2.msra.mxu0 0.0
    %99 = vmatprep.subr.mxu0 0.0
    %100 = vmatpush2.msra.mxu0 0.0
    %101 = vmatprep.subr.mxu0 0.0
    %102 = vmatpush2.msra.mxu0 0.0
    %103 = vmatprep.subr.mxu0 0.0
    %104 = vmatpush2.msra.mxu0 0.0
    %105 = vmatprep.subr.mxu0 0.0
    %106 = vmatpush2.msra.mxu0 0.0
    %107 = vmatprep.subr.mxu0 0.0
    %108 = vmatpush2.msra.mxu0 0.0
    %109 = vmatprep.subr.mxu0 0.0
    %110 = vmatpush2.msra.mxu0 0.0
    %111 = vmatprep.subr.mxu0 0.0
    %112 = vmatpush2.msra.mxu0 0.0
    %113 = vmatprep.mubr.f32.mxu0 0.0
    %114 = vmatmul.mubr.f32.gmra.mxu0 %v47
    %v115 = vpop.f32.mrf.mxu0
    %v116 = vadd.f32 0.0, %v115
    %v117 = vpop.f32.mrf.mxu0
    %118 = vdwg.mxu0
    %v119 = vmul.f32 %v116, 0.5
    %120 = vst [vmem:[#allocation5] sm:$0xff] %v119
    // Predicated region
    $region14: #{tpu_custom_call.1} parent=1 // pred_check
      _
    $region15: #{tpu_custom_call.1} parent=1 // pred_check_branch
      %122 = sbr.rel (0) target = $region17
    $region16: #{tpu_custom_call.1} parent=1 // pred_region
      %s124 = ssub.s32 128, 128
      %125 = vsyncadd [#allocation4], %s124
      %s127 = sshll.u32 [#allocation5], 4
      %s128 = int_to_ptr.vmem [resolvable:$true] %s127
      %130 = dma.vmem_to_hbm [thread:$0]  %s128, 128, %s2, [#allocation4]
    $region17: #{tpu_custom_call.1} parent=1 // pred_fallthru
      _
    // Predicated region
    $region18: #{tpu_custom_call.1} parent=1 // pred_check
      _
    $region19: #{tpu_custom_call.1} parent=1 // pred_check_branch
      %132 = sbr.rel (0) target = $region21
    $region20: #{tpu_custom_call.1} parent=1 // pred_region
      %133 = dma.done [#allocation4], 128
    $region21: #{tpu_custom_call.1} parent=1 // pred_fallthru
      _
    %134 = vsyncpa [#allocation3], 1
    %135 = vsyncpa [#allocation4], 1

</llo_original>
